<compile_context>
chip_gen: v7x
topology: tpu7x:2x2x1
jax: 0.10.0
libtpu: 0.0.40
codegen_flags: <defaults>
</compile_context>

<pallas_src>
import math

import numpy as np

import jax
import jax.numpy as jnp
from jax.experimental import pallas as pl
from jax.experimental.pallas import tpu as pltpu

SUBLANES = 8     # native f32 tile is (8, 128); use one full tile for I/O
LANES = 128
N_VALUES = 6     # number of special values produced

# ---------------------------------------------------------------------------
# Host-side double-precision constant folding (gamma has no device primitive;
# everything else is folded too for accuracy + zero in-kernel scalar work).
# ---------------------------------------------------------------------------
_G14 = math.gamma(1.0 / 4.0)
_G13 = math.gamma(1.0 / 3.0)
_PI34 = math.pi ** 0.75

_ETA_I = _G14 / (2.0 * _PI34)
_ETA_HALF_I = _G14 / (2.0 ** (7.0 / 8.0) * _PI34)
_ETA_2I = _G14 / (2.0 ** (11.0 / 8.0) * _PI34)
_ETA_3I = _G14 / (2.0 * 3.0 ** (1.0 / 3.0)
                  * (3.0 + 2.0 * math.sqrt(3.0)) ** (1.0 / 12.0) * _PI34)
_ETA_4I = ((-1.0 + math.sqrt(2.0)) ** (1.0 / 4.0)) * _G14 / (2.0 ** (29.0 / 16.0) * _PI34)

# eta(e^{2 pi i / 3}) = exp(-i pi / 24) * 3^{1/8} * Gamma(1/3)^{3/2} / (2 pi)
_MAG = (3.0 ** (1.0 / 8.0)) * (_G13 ** 1.5) / (2.0 * math.pi)
_ETA_W_RE = math.cos(-math.pi / 24.0) * _MAG
_ETA_W_IM = math.sin(-math.pi / 24.0) * _MAG

# Single (8,128) f32 slab: row 0 = real parts, row 1 = imag parts, rest zero.
_CONST_SLAB = np.zeros((SUBLANES, LANES), dtype=np.float32)
_CONST_SLAB[0, :N_VALUES] = [_ETA_I, _ETA_HALF_I, _ETA_2I, _ETA_3I, _ETA_4I, _ETA_W_RE]
_CONST_SLAB[1, 5] = _ETA_W_IM


def _eta_kernel(const_ref, out_ref):
    # Pure constant emission: one full-tile load + one unmasked full-tile store.
    out_ref[...] = const_ref[...]


def dedekind_eta_special_values(tau: jax.Array) -> jax.Array:
    """Returns the 6 special Dedekind eta values as a complex64 (6,) vector.

    `tau` is accepted for API parity with the PyTorch forward but is ignored
    (the special values are fixed constants), so it is NOT fed to the kernel.
    """
    del tau  # dead input per the reference semantics; avoid a pointless DMA

    const_slab = jnp.asarray(_CONST_SLAB)  # already float32

    slab = pl.pallas_call(
        _eta_kernel,
        out_shape=jax.ShapeDtypeStruct((SUBLANES, LANES), jnp.float32),
        in_specs=[pl.BlockSpec(memory_space=pltpu.MemorySpace.VMEM)],
        out_specs=pl.BlockSpec(memory_space=pltpu.MemorySpace.VMEM),
    )(const_slab)

    # TPU Pallas has no complex dtype in-kernel; assemble complex64 outside.
    return jax.lax.complex(slab[0, :N_VALUES], slab[1, :N_VALUES])


if __name__ == "__main__":
    key = jax.random.PRNGKey(0)
    # batch of 8 "tau" values; contents are irrelevant (forward ignores tau).
    tau = jax.random.normal(key, (8,), dtype=jnp.float32)

    out = dedekind_eta_special_values(tau)
    out = jax.block_until_ready(out)

    # Reference check against host-side double-precision math (same formulas).
    ref = [
        _ETA_I,
        _ETA_HALF_I,
        _ETA_2I,
        _ETA_3I,
        _ETA_4I,
        complex(_ETA_W_RE, _ETA_W_IM),
    ]
    ref = jnp.asarray(ref, dtype=jnp.complex64)

    assert out.shape == (N_VALUES,) and out.dtype == jnp.complex64
    assert jnp.allclose(out, ref, rtol=1e-6, atol=1e-7)
    print("KERNEL_OK")
</pallas_src>

<mosaic_0001>
module attributes {stable_mosaic.version = 11 : i64} {
  func.func @_eta_kernel(%arg0: memref<8x128xf32, #tpu.memory_space<vmem>>, %arg1: memref<8x128xf32, #tpu.memory_space<vmem>>) attributes {dimension_semantics = [], scalar_prefetch = 0 : i64, scratch_operands = 0 : i64, tpu.core_type = #tpu.core_type<tc>} {
    %c0 = arith.constant 0 : index
    %c0_0 = arith.constant 0 : index
    %0 = vector.load %arg0[%c0, %c0_0] : memref<8x128xf32, #tpu.memory_space<vmem>>, vector<8x128xf32>
    %c0_1 = arith.constant 0 : index
    %c0_2 = arith.constant 0 : index
    %1 = vector.load %arg1[%c0_1, %c0_2] : memref<8x128xf32, #tpu.memory_space<vmem>>, vector<8x128xf32>
    tpu.vector_store %arg1[%c0_1, %c0_2], %0 {strides = array<i32>} : memref<8x128xf32, #tpu.memory_space<vmem>>, vector<8x128xf32>,
    return
  }
}

</mosaic_0001>

<llo_original>
// kernel: tpu_custom_call.1
$region0: #{tpu_custom_call.1}
  #allocation0 [shape = 'u32[]', space=smem, size = 0x4, offset = 0x4, fixed_abs, tag = 'smem constant byte address 0x4 - core index']
  #allocation1 [shape = 'u32[144,128]{1,0:T(1,128)}', space=vmem, size = 0x12000, scoped, tag = 'internal scratch']
  %s0 = inlined_call_operand.hbm [shape: f32[8,128], index: 0, kind: input, shape index: {}]
  %s1 = inlined_call_operand.hbm [shape: f32[8,128], index: 1, kind: output, shape index: {}]
  %s2 = sld [smem:[#allocation0]]
  $region18: #{tpu_custom_call.1} parent=0
    _
  %s4 = ssub.s32 1, %s2
  %s5 = scalar_select 0, %s4, %s2
  $region1: #{tpu_custom_call.1} parent=0
    #allocation2 [shape = 'u8[4096]{0}', space=vmem, size = 0x1000, scoped, tag = 'input window, operand 0, single buffered']
    #allocation3 [shape = 's32[1]{0}', space=sflag, size = 0x4, scoped, tag = 'scoped memory for tpu_custom_call.1']
    #allocation4 [shape = 's32[1]{0}', space=sflag, size = 0x4, scoped, tag = 'scoped memory for tpu_custom_call.1']
    #allocation5 [shape = 'u8[4096]{0}', space=vmem, size = 0x1000, scoped, tag = 'output window, operand 0, single buffered']
    %6 = vsyncpa [#allocation3], 0
    %7 = vsyncpa [#allocation4], 0
    // Predicated region
    $region2: #{tpu_custom_call.1} parent=1 // pred_check
      _
    $region3: #{tpu_custom_call.1} parent=1 // pred_check_branch
      %9 = sbr.rel (0) target = $region5
    $region4: #{tpu_custom_call.1} parent=1 // pred_region
      %s11 = ssub.s32 128, 128
      %12 = vsyncadd [#allocation3], %s11
      %s14 = sshll.u32 [#allocation2], 4
      %s15 = int_to_ptr.vmem [resolvable:$true] %s14
      %17 = dma.hbm_to_vmem [thread:$0]  %s0, 128, %s15, [#allocation3]
    $region5: #{tpu_custom_call.1} parent=1 // pred_fallthru
      _
    // Predicated region
    $region6: #{tpu_custom_call.1} parent=1 // pred_check
      _
    $region7: #{tpu_custom_call.1} parent=1 // pred_check_branch
      %19 = sbr.rel (0) target = $region9
    $region8: #{tpu_custom_call.1} parent=1 // pred_region
      %20 = dma.done [#allocation3], 128
    $region9: #{tpu_custom_call.1} parent=1 // pred_fallthru
      _
    %v21 = vld [vmem:[#allocation2] sm:$0xff]
    %22 = vst [vmem:[#allocation5] sm:$0xff] %v21
    // Predicated region
    $region10: #{tpu_custom_call.1} parent=1 // pred_check
      _
    $region11: #{tpu_custom_call.1} parent=1 // pred_check_branch
      %24 = sbr.rel (0) target = $region13
    $region12: #{tpu_custom_call.1} parent=1 // pred_region
      %s26 = ssub.s32 128, 128
      %27 = vsyncadd [#allocation4], %s26
      %s29 = sshll.u32 [#allocation5], 4
      %s30 = int_to_ptr.vmem [resolvable:$true] %s29
      %32 = dma.vmem_to_hbm [thread:$0]  %s30, 128, %s1, [#allocation4]
    $region13: #{tpu_custom_call.1} parent=1 // pred_fallthru
      _
    // Predicated region
    $region14: #{tpu_custom_call.1} parent=1 // pred_check
      _
    $region15: #{tpu_custom_call.1} parent=1 // pred_check_branch
      %34 = sbr.rel (0) target = $region17
    $region16: #{tpu_custom_call.1} parent=1 // pred_region
      %35 = dma.done [#allocation4], 128
    $region17: #{tpu_custom_call.1} parent=1 // pred_fallthru
      _
    %36 = vsyncpa [#allocation3], 1
    %37 = vsyncpa [#allocation4], 1

</llo_original>
